<compile_context>
chip_gen: v6e
topology: v6e:2x2x1
jax: 0.10.0
libtpu: 0.0.40
codegen_flags: <defaults>
</compile_context>

<pallas_src>
import functools
import math

import jax
import jax.numpy as jnp
from jax.experimental import pallas as pl
from jax.experimental.pallas import tpu as pltpu


def _wpn_kernel(embT_ref, w1_ref, b1_ref, w2_ref, b2_ref, out_ref, *, softmax):
    # embT_ref: (M, tm)   -- embeddings, transposed, D on lanes
    # w1_ref:   (H1, M)   b1_ref: (H1, 1)
    # w2_ref:   (H2, H1)  b2_ref: (H2, 1)
    # out_ref:  (H2, tm)  -- this IS W.T already (lane-dense along D)
    xT = embT_ref[...]
    hT = jnp.tanh(
        jnp.dot(w1_ref[...], xT, preferred_element_type=jnp.float32) + b1_ref[...]
    )
    oT = jnp.tanh(
        jnp.dot(w2_ref[...], hT, preferred_element_type=jnp.float32) + b2_ref[...]
    )
    if softmax:
        # F.softmax(W, dim=1): softmax over H2 == axis 0 of oT (sublane reduce, XLU).
        # The block always covers ALL of H2, so tiling over D never changes this result.
        m = jnp.max(oT, axis=0, keepdims=True)
        e = jnp.exp(oT - m)
        oT = e / jnp.sum(e, axis=0, keepdims=True)  # exact reciprocal: rows sum to 1
    out_ref[...] = oT.astype(out_ref.dtype)


def _pick_tile(D, cap=4096):
    """Largest multiple of 128 that divides D and is <= cap; D itself if D <= cap."""
    if D <= cap:
        return D
    tm = (cap // 128) * 128
    while tm >= 128:
        if D % tm == 0:
            return tm
        tm -= 128
    return D  # fallback: single step (caller assertion will catch pathological D)


def weight_predictor_forward(embedding_matrix_T, w1, b1, w2, b2, *,
                             softmax_diet_network=False, tm=None):
    """Pallas implementation of WeightPredictorNetwork.forward().

    embedding_matrix_T: (M, D) float32  -- the module's (D, M) buffer, stored transposed
    w1: (H1, M), b1: (H1,), w2: (H2, H1), b2: (H2,)   (PyTorch nn.Linear (out, in) layout)
    returns: (H2, D)  == W.T, computed inside the kernel (no wrapper transpose)
    """
    M, D = embedding_matrix_T.shape
    H1 = w1.shape[0]
    H2 = w2.shape[0]
    assert w1.shape == (H1, M) and w2.shape == (H2, H1)

    if tm is None:
        tm = _pick_tile(D)
    assert D % tm == 0, "D must be divisible by the tile size"
    assert tm == D or tm % 128 == 0, "when tiling D, tm must be a multiple of 128"
    # NOTE: H2 as the output sublane dim must be a multiple of 8 or the full extent
    # (it is the full extent here, so any H2 works).

    b1_2d = b1.reshape(H1, 1)
    b2_2d = b2.reshape(H2, 1)

    kernel = functools.partial(_wpn_kernel, softmax=softmax_diet_network)

    # VMEM budget: double-buffered input/output tiles + resident weights + headroom.
    weights_bytes = 4 * (H1 * M + H1 + H2 * H1 + H2)
    tile_bytes = 4 * 2 * (M * tm + H2 * tm)          # 2x for double buffering
    vmem_limit = int(min(2 * (weights_bytes + tile_bytes) + (2 << 20), 64 << 20))

    flops = 2 * D * M * H1 + 2 * D * H1 * H2
    transcendentals = D * (H1 + H2) + (D * H2 if softmax_diet_network else 0)
    bytes_accessed = 4 * (M * D + H1 * M + H1 + H2 * H1 + H2 + H2 * D)

    out = pl.pallas_call(
        kernel,
        out_shape=jax.ShapeDtypeStruct((H2, D), jnp.float32),
        grid_spec=pl.GridSpec(
            grid=(D // tm,),
            in_specs=[
                pl.BlockSpec((M, tm), lambda i: (0, i)),     # embeddings tile (D on lanes)
                pl.BlockSpec((H1, M), lambda i: (0, 0)),     # W1 (resident, full)
                pl.BlockSpec((H1, 1), lambda i: (0, 0)),     # b1
                pl.BlockSpec((H2, H1), lambda i: (0, 0)),    # W2 (resident, full)
                pl.BlockSpec((H2, 1), lambda i: (0, 0)),     # b2
            ],
            out_specs=pl.BlockSpec((H2, tm), lambda i: (0, i)),  # W.T tile, lane-dense along D
        ),
        compiler_params=pltpu.CompilerParams(
            dimension_semantics=("parallel",),   # shards D tiles across cores on v7x
            vmem_limit_bytes=vmem_limit,
        ),
        cost_estimate=pl.CostEstimate(
            flops=flops,
            transcendentals=transcendentals,
            bytes_accessed=bytes_accessed,
        ),
    )(embedding_matrix_T, w1, b1_2d, w2, b2_2d)

    return out  # already W.T


def _reference_forward(embedding_matrix, w1, b1, w2, b2, softmax_diet_network=False):
    # embedding_matrix: (D, M); w1/w2 in PyTorch (out, in) layout.
    h = jnp.tanh(embedding_matrix @ w1.T + b1)
    o = jnp.tanh(h @ w2.T + b2)
    if softmax_diet_network:
        o = jax.nn.softmax(o, axis=1)
    return o.T


if __name__ == "__main__":
    # Small shapes consistent with the module:
    #   D = 128 features, M = 32 embedding size, diet_network_dims = [64, 16]
    D, M = 128, 32
    H1, H2 = 64, 16

    key = jax.random.PRNGKey(0)
    k_emb, k_w1, k_b1, k_w2, k_b2 = jax.random.split(key, 5)

    embedding_matrix = jax.random.normal(k_emb, (D, M), dtype=jnp.float32)
    # One-time layout change at the call site: store the buffer transposed (M, D).
    embedding_matrix_T = jnp.asarray(embedding_matrix.T)

    # nn.init.uniform_(layer.weight, -0.01, 0.01); biases keep PyTorch default
    # U(-1/sqrt(fan_in), 1/sqrt(fan_in)).  Weights in PyTorch (out, in) layout.
    w1 = jax.random.uniform(k_w1, (H1, M), minval=-0.01, maxval=0.01, dtype=jnp.float32)
    b1 = jax.random.uniform(k_b1, (H1,), minval=-1.0 / jnp.sqrt(M),
                            maxval=1.0 / jnp.sqrt(M), dtype=jnp.float32)
    w2 = jax.random.uniform(k_w2, (H2, H1), minval=-0.01, maxval=0.01, dtype=jnp.float32)
    b2 = jax.random.uniform(k_b2, (H2,), minval=-1.0 / jnp.sqrt(H1),
                            maxval=1.0 / jnp.sqrt(H1), dtype=jnp.float32)

    # softmax_diet_network = False (base config)
    out = weight_predictor_forward(embedding_matrix_T, w1, b1, w2, b2,
                                   softmax_diet_network=False)
    out = jax.block_until_ready(out)
    ref = _reference_forward(embedding_matrix, w1, b1, w2, b2, softmax_diet_network=False)
    assert out.shape == (H2, D), out.shape
    assert jnp.allclose(out, ref, atol=1e-5, rtol=1e-4), float(jnp.max(jnp.abs(out - ref)))

    # Also exercise the softmax branch (exact reciprocal now -> tight tolerance).
    out_sm = weight_predictor_forward(embedding_matrix_T, w1, b1, w2, b2,
                                      softmax_diet_network=True)
    out_sm = jax.block_until_ready(out_sm)
    ref_sm = _reference_forward(embedding_matrix, w1, b1, w2, b2, softmax_diet_network=True)
    assert out_sm.shape == (H2, D), out_sm.shape
    assert jnp.allclose(out_sm, ref_sm, atol=1e-5, rtol=1e-4), \
        float(jnp.max(jnp.abs(out_sm - ref_sm)))

    # Rows of softmaxed W sum to 1 (exact reciprocal).
    assert jnp.allclose(jnp.sum(out_sm, axis=0), 1.0, atol=1e-5)

    print("KERNEL_OK")
</pallas_src>

<mosaic_0001>
module attributes {stable_mosaic.version = 11 : i64} {
  func.func @_wpn_kernel(%arg0: i32, %arg1: memref<32x128xf32, #tpu.memory_space<vmem>>, %arg2: memref<64x32xf32, #tpu.memory_space<vmem>>, %arg3: memref<64x1xf32, #tpu.memory_space<vmem>>, %arg4: memref<16x64xf32, #tpu.memory_space<vmem>>, %arg5: memref<16x1xf32, #tpu.memory_space<vmem>>, %arg6: memref<16x128xf32, #tpu.memory_space<vmem>>) attributes {dimension_semantics = [#tpu.dimension_semantics<parallel>], iteration_bounds = array<i64: 1>, scalar_prefetch = 0 : i64, scratch_operands = 0 : i64, tpu.core_type = #tpu.core_type<tc>, window_params = [{transform_indices = @transform_0, window_bounds = array<i64: 32, 128>}, {pipeline_mode = #tpu.pipeline_mode<synchronous>, transform_indices = @transform_1, window_bounds = array<i64: 64, 32>}, {pipeline_mode = #tpu.pipeline_mode<synchronous>, transform_indices = @transform_2, window_bounds = array<i64: 64, 1>}, {pipeline_mode = #tpu.pipeline_mode<synchronous>, transform_indices = @transform_3, window_bounds = array<i64: 16, 64>}, {pipeline_mode = #tpu.pipeline_mode<synchronous>, transform_indices = @transform_4, window_bounds = array<i64: 16, 1>}, {transform_indices = @transform_5, window_bounds = array<i64: 16, 128>}]} {
    %c0 = arith.constant 0 : index
    %c0_0 = arith.constant 0 : index
    %0 = vector.load %arg1[%c0, %c0_0] : memref<32x128xf32, #tpu.memory_space<vmem>>, vector<32x128xf32>
    %c0_1 = arith.constant 0 : index
    %c0_2 = arith.constant 0 : index
    %1 = vector.load %arg2[%c0_1, %c0_2] : memref<64x32xf32, #tpu.memory_space<vmem>>, vector<64x32xf32>
    %cst = arith.constant dense<0.000000e+00> : vector<64x128xf32>
    %2 = tpu.matmul %1, %0, %cst {dimension_numbers = #tpu.dot_dimension_numbers<[1], [0], [0], [1], [0, 0, 1, 1], [], []>} : vector<64x32xf32>, vector<32x128xf32>, vector<64x128xf32> -> vector<64x128xf32>
    %c0_3 = arith.constant 0 : index
    %c0_4 = arith.constant 0 : index
    %3 = vector.load %arg3[%c0_3, %c0_4] : memref<64x1xf32, #tpu.memory_space<vmem>>, vector<64x1xf32>
    %4 = vector.broadcast %3 : vector<64x1xf32> to vector<64x128xf32>
    %5 = arith.addf %2, %4 : vector<64x128xf32>
    %6 = math.tanh %5 : vector<64x128xf32>
    %c0_5 = arith.constant 0 : index
    %c0_6 = arith.constant 0 : index
    %7 = vector.load %arg4[%c0_5, %c0_6] : memref<16x64xf32, #tpu.memory_space<vmem>>, vector<16x64xf32>
    %cst_7 = arith.constant dense<0.000000e+00> : vector<16x128xf32>
    %8 = tpu.matmul %7, %6, %cst_7 {dimension_numbers = #tpu.dot_dimension_numbers<[1], [0], [0], [1], [0, 0, 1, 1], [], []>} : vector<16x64xf32>, vector<64x128xf32>, vector<16x128xf32> -> vector<16x128xf32>
    %c0_8 = arith.constant 0 : index
    %c0_9 = arith.constant 0 : index
    %9 = vector.load %arg5[%c0_8, %c0_9] : memref<16x1xf32, #tpu.memory_space<vmem>>, vector<16x1xf32>
    %10 = vector.broadcast %9 : vector<16x1xf32> to vector<16x128xf32>
    %11 = arith.addf %8, %10 : vector<16x128xf32>
    %12 = math.tanh %11 : vector<16x128xf32>
    %c0_10 = arith.constant 0 : index
    %c0_11 = arith.constant 0 : index
    %13 = vector.load %arg6[%c0_10, %c0_11] : memref<16x128xf32, #tpu.memory_space<vmem>>, vector<16x128xf32>
    tpu.vector_store %arg6[%c0_10, %c0_11], %12 {strides = array<i32>} : memref<16x128xf32, #tpu.memory_space<vmem>>, vector<16x128xf32>,
    return
  }
  func.func @transform_0(%arg0: i32) -> (i32, i32) {
    %c0_i32 = arith.constant 0 : i32
    %c0_i32_0 = arith.constant 0 : i32
    return %c0_i32, %arg0 : i32, i32
  }
  func.func @transform_1(%arg0: i32) -> (i32, i32) {
    %c0_i32 = arith.constant 0 : i32
    %c0_i32_0 = arith.constant 0 : i32
    %c0_i32_1 = arith.constant 0 : i32
    return %c0_i32, %c0_i32_0 : i32, i32
  }
  func.func @transform_2(%arg0: i32) -> (i32, i32) {
    %c0_i32 = arith.constant 0 : i32
    %c0_i32_0 = arith.constant 0 : i32
    %c0_i32_1 = arith.constant 0 : i32
    return %c0_i32, %c0_i32_0 : i32, i32
  }
  func.func @transform_3(%arg0: i32) -> (i32, i32) {
    %c0_i32 = arith.constant 0 : i32
    %c0_i32_0 = arith.constant 0 : i32
    %c0_i32_1 = arith.constant 0 : i32
    return %c0_i32, %c0_i32_0 : i32, i32
  }
  func.func @transform_4(%arg0: i32) -> (i32, i32) {
    %c0_i32 = arith.constant 0 : i32
    %c0_i32_0 = arith.constant 0 : i32
    %c0_i32_1 = arith.constant 0 : i32
    return %c0_i32, %c0_i32_0 : i32, i32
  }
  func.func @transform_5(%arg0: i32) -> (i32, i32) {
    %c0_i32 = arith.constant 0 : i32
    %c0_i32_0 = arith.constant 0 : i32
    return %c0_i32, %arg0 : i32, i32
  }
}

</mosaic_0001>

<llo_original>
// kernel: tpu_custom_call.1
$region0: #{tpu_custom_call.1}
  #allocation0 [shape = 'u32[]', space=smem, size = 0x4, offset = 0x4, fixed_abs, tag = 'smem constant byte address 0x4 - core index']
  #allocation1 [shape = 'u32[144,128]{1,0:T(1,128)}', space=vmem, size = 0x12000, scoped, tag = 'internal scratch']
  %s0 = inlined_call_operand.vmem [shape: f32[32,128], index: 0, kind: input, shape index: {}]
  %s1 = inlined_call_operand.vmem [shape: f32[64,32], index: 1, kind: input, shape index: {}]
  %s2 = inlined_call_operand.vmem [shape: f32[64,1], index: 2, kind: input, shape index: {}]
  %s3 = inlined_call_operand.vmem [shape: f32[16,64], index: 3, kind: input, shape index: {}]
  %s4 = inlined_call_operand.vmem [shape: f32[16,1], index: 4, kind: input, shape index: {}]
  %s5 = inlined_call_operand.hbm [shape: f32[16,128], index: 5, kind: output, shape index: {}]
  %s6 = sld [smem:[#allocation0]]
  $region30: #{tpu_custom_call.1} parent=0
    _
  %s8 = ssub.s32 1, %s6
  %s9 = scalar_select 0, %s8, %s6
  $region1: #{tpu_custom_call.1} parent=0
    #allocation2 [shape = 'u8[8192]{0}', space=vmem, size = 0x2000, scoped, tag = 'output window, operand 0, single buffered']
    #allocation3 [shape = 's32[1]{0}', space=sflag, size = 0x4, scoped, tag = 'scoped memory for tpu_custom_call.1']
    %10 = vsyncpa [#allocation3], 0
    // Predicated region
    $region2: #{tpu_custom_call.1} parent=1 // pred_check
      _
    $region3: #{tpu_custom_call.1} parent=1 // pred_check_branch
      %12 = sbr.rel (0) target = $region5
    $region4: #{tpu_custom_call.1} parent=1 // pred_region
      _
    $region5: #{tpu_custom_call.1} parent=1 // pred_fallthru
      _
    // Predicated region
    $region6: #{tpu_custom_call.1} parent=1 // pred_check
      _
    $region7: #{tpu_custom_call.1} parent=1 // pred_check_branch
      %14 = sbr.rel (0) target = $region9
    $region8: #{tpu_custom_call.1} parent=1 // pred_region
      _
    $region9: #{tpu_custom_call.1} parent=1 // pred_fallthru
      _
    // Predicated region
    $region10: #{tpu_custom_call.1} parent=1 // pred_check
      _
    $region11: #{tpu_custom_call.1} parent=1 // pred_check_branch
      %16 = sbr.rel (0) target = $region13
    $region12: #{tpu_custom_call.1} parent=1 // pred_region
      _
    $region13: #{tpu_custom_call.1} parent=1 // pred_fallthru
      _
    // Predicated region
    $region14: #{tpu_custom_call.1} parent=1 // pred_check
      _
    $region15: #{tpu_custom_call.1} parent=1 // pred_check_branch
      %18 = sbr.rel (0) target = $region17
    $region16: #{tpu_custom_call.1} parent=1 // pred_region
      _
    $region17: #{tpu_custom_call.1} parent=1 // pred_fallthru
      _
    // Predicated region
    $region18: #{tpu_custom_call.1} parent=1 // pred_check
      _
    $region19: #{tpu_custom_call.1} parent=1 // pred_check_branch
      %20 = sbr.rel (0) target = $region21
    $region20: #{tpu_custom_call.1} parent=1 // pred_region
      _
    $region21: #{tpu_custom_call.1} parent=1 // pred_fallthru
      _
    %v21 = vld [vmem:[%s0] sm:$0xff]
    %v22 = vld [vmem:[%s0 + $0x8] sm:$0xff]
    %v23 = vld [vmem:[%s0 + $0x10] sm:$0xff]
    %v24 = vld [vmem:[%s0 + $0x18] sm:$0xff]
    %v25 = vld [vmem:[%s1] sm:$0xff]
    %v26 = vld [vmem:[%s1 + $0x8] sm:$0xff]
    %v27 = vld [vmem:[%s1 + $0x10] sm:$0xff]
    %v28 = vld [vmem:[%s1 + $0x18] sm:$0xff]
    %v29 = vld [vmem:[%s1 + $0x20] sm:$0xff]
    %v30 = vld [vmem:[%s1 + $0x28] sm:$0xff]
    %v31 = vld [vmem:[%s1 + $0x30] sm:$0xff]
    %v32 = vld [vmem:[%s1 + $0x38] sm:$0xff]
    %v33 = vld [vmem:[%s2] sm:$0xff]
    %v34 = vld [vmem:[%s2 + $0x8] sm:$0xff]
    %v35 = vld [vmem:[%s2 + $0x10] sm:$0xff]
    %v36 = vld [vmem:[%s2 + $0x18] sm:$0xff]
    %v37 = vld [vmem:[%s2 + $0x20] sm:$0xff]
    %v38 = vld [vmem:[%s2 + $0x28] sm:$0xff]
    %v39 = vld [vmem:[%s2 + $0x30] sm:$0xff]
    %v40 = vld [vmem:[%s2 + $0x38] sm:$0xff]
    %42 = vset.pattern.permute.xlu0 0
    %43 = vperm.xlu0 %42, %v33
    %v44 = vpop.permute.xlu0 %43
    %47 = vset.pattern.permute.xlu0 0
    %48 = vperm.xlu0 %47, %v34
    %v49 = vpop.permute.xlu0 %48
    %52 = vset.pattern.permute.xlu0 0
    %53 = vperm.xlu0 %52, %v35
    %v54 = vpop.permute.xlu0 %53
    %57 = vset.pattern.permute.xlu0 0
    %58 = vperm.xlu0 %57, %v36
    %v59 = vpop.permute.xlu0 %58
    %62 = vset.pattern.permute.xlu0 0
    %63 = vperm.xlu0 %62, %v37
    %v64 = vpop.permute.xlu0 %63
    %67 = vset.pattern.permute.xlu0 0
    %68 = vperm.xlu0 %67, %v38
    %v69 = vpop.permute.xlu0 %68
    %72 = vset.pattern.permute.xlu0 0
    %73 = vperm.xlu0 %72, %v39
    %v74 = vpop.permute.xlu0 %73
    %77 = vset.pattern.permute.xlu0 0
    %78 = vperm.xlu0 %77, %v40
    %v79 = vpop.permute.xlu0 %78
    %vm81 = vcmask 261120
    %v83 = vsel %vm81, %v25, 0
    %v86 = vsel %vm81, %v26, 0
    %v89 = vsel %vm81, %v27, 0
    %v92 = vsel %vm81, %v28, 0
    %v95 = vsel %vm81, %v29, 0
    %v98 = vsel %vm81, %v30, 0
    %v101 = vsel %vm81, %v31, 0
    %v104 = vsel %vm81, %v32, 0
    %106 = vmatprep.subr.mxu0 0.0
    %107 = vmatpush1.msra.mxu0 0.0
    %108 = vmatprep.subr.mxu0 0.0
    %109 = vmatpush1.msra.mxu0 0.0
    %110 = vmatprep.subr.mxu0 0.0
    %111 = vmatpush1.msra.mxu0 0.0
    %112 = vmatprep.subr.mxu0 0.0
    %113 = vmatpush1.msra.mxu0 0.0
    %114 = vmatprep.subr.mxu0 0.0
    %115 = vmatpush1.msra.mxu0 0.0
    %116 = vmatprep.subr.mxu0 0.0
    %117 = vmatpush1.msra.mxu0 0.0
    %118 = vmatprep.subr.mxu0 0.0
    %119 = vmatpush1.msra.mxu0 0.0
    %120 = vmatprep.subr.mxu0 0.0
    %121 = vmatpush1.msra.mxu0 0.0
    %122 = vmatprep.subr.mxu0 0.0
    %123 = vmatpush1.msra.mxu0 0.0
    %124 = vmatprep.subr.mxu0 0.0
    %125 = vmatpush1.msra.mxu0 0.0
    %126 = vmatprep.subr.mxu0 0.0
    %127 = vmatpush1.msra.mxu0 0.0
    %128 = vmatprep.subr.mxu0 0.0
    %129 = vmatpush1.msra.mxu0 0.0
    %130 = vmatprep.subr.mxu0 0.0
    %131 = vmatpush1.msra.mxu0 %v24
    %132 = vmatprep.subr.mxu0 0.0
    %133 = vmatpush1.msra.mxu0 %v23
    %134 = vmatprep.subr.mxu0 0.0
    %135 = vmatpush1.msra.mxu0 %v22
    %136 = vmatprep.subr.mxu0 0.0
    %137 = vmatpush1.msra.mxu0 %v21
    %138 = vmatprep.subr.mxu0 0.0
    %139 = vmatpush2.msra.mxu0 0.0
    %140 = vmatprep.subr.mxu0 0.0
    %141 = vmatpush2.msra.mxu0 0.0
    %142 = vmatprep.subr.mxu0 0.0
    %143 = vmatpush2.msra.mxu0 0.0
    %144 = vmatprep.subr.mxu0 0.0
    %145 = vmatpush2.msra.mxu0 0.0
    %146 = vmatprep.subr.mxu0 0.0
    %147 = vmatpush2.msra.mxu0 0.0
    %148 = vmatprep.subr.mxu0 0.0
    %149 = vmatpush2.msra.mxu0 0.0
    %150 = vmatprep.subr.mxu0 0.0
    %151 = vmatpush2.msra.mxu0 0.0
    %152 = vmatprep.subr.mxu0 0.0
    %153 = vmatpush2.msra.mxu0 0.0
    %154 = vmatprep.subr.mxu0 0.0
    %155 = vmatpush2.msra.mxu0 0.0
    %156 = vmatprep.subr.mxu0 0.0
    %157 = vmatpush2.msra.mxu0 0.0
    %158 = vmatprep.subr.mxu0 0.0
    %159 = vmatpush2.msra.mxu0 0.0
    %160 = vmatprep.subr.mxu0 0.0
    %161 = vmatpush2.msra.mxu0 0.0
    %162 = vmatprep.subr.mxu0 0.0
    %163 = vmatpush2.msra.mxu0 0.0
    %164 = vmatprep.subr.mxu0 0.0
    %165 = vmatpush2.msra.mxu0 0.0
    %166 = vmatprep.subr.mxu0 0.0
    %167 = vmatpush2.msra.mxu0 0.0
    %168 = vmatprep.subr.mxu0 0.0
    %169 = vmatpush2.msra.mxu0 0.0
    %170 = vmatprep.mubr.f32.mxu0 0.0
    %171 = vmatmul.mubr.f32.gmra.mxu0 %v83
    %v172 = vpop.f32.mrf.mxu0
    %v173 = vadd.f32 %v44, %v172
    %v174 = vpop.f32.mrf.mxu0
    %175 = vmatprep.mubr.f32.mxu0 0.0
    %176 = vmatmul.mubr.f32.gmra.mxu0 %v86
    %v177 = vpop.f32.mrf.mxu0
    %v178 = vadd.f32 %v49, %v177
    %v179 = vpop.f32.mrf.mxu0
    %180 = vmatprep.mubr.f32.mxu0 0.0
    %181 = vmatmul.mubr.f32.gmra.mxu0 %v89
    %v182 = vpop.f32.mrf.mxu0
    %v183 = vadd.f32 %v54, %v182
    %v184 = vpop.f32.mrf.mxu0
    %185 = vmatprep.mubr.f32.mxu0 0.0
    %186 = vmatmul.mubr.f32.gmra.mxu0 %v92
    %v187 = vpop.f32.mrf.mxu0
    %v188 = vadd.f32 %v59, %v187
    %v189 = vpop.f32.mrf.mxu0
    %190 = vmatprep.mubr.f32.mxu0 0.0
    %191 = vmatmul.mubr.f32.gmra.mxu0 %v95
    %v192 = vpop.f32.mrf.mxu0
    %v193 = vadd.f32 %v64, %v192
    %v194 = vpop.f32.mrf.mxu0
    %195 = vmatprep.mubr.f32.mxu0 0.0
    %196 = vmatmul.mubr.f32.gmra.mxu0 %v98
    %v197 = vpop.f32.mrf.mxu0
    %v198 = vadd.f32 %v69, %v197
    %v199 = vpop.f32.mrf.mxu0
    %200 = vmatprep.mubr.f32.mxu0 0.0
    %201 = vmatmul.mubr.f32.gmra.mxu0 %v101
    %v202 = vpop.f32.mrf.mxu0
    %v203 = vadd.f32 %v74, %v202
    %v204 = vpop.f32.mrf.mxu0
    %205 = vmatprep.mubr.f32.mxu0 0.0
    %206 = vmatmul.mubr.f32.gmra.mxu0 %v104
    %v207 = vpop.f32.mrf.mxu0
    %v208 = vadd.f32 %v79, %v207
    %v209 = vpop.f32.mrf.mxu0
    %210 = vdwg.mxu0
    %v211 = vtanh.pop %v173
    %v212 = vtanh.pop %v178
    %v213 = vtanh.pop %v183
    %v214 = vtanh.pop %v188
    %v215 = vtanh.pop %v193
    %v216 = vtanh.pop %v198
    %v217 = vtanh.pop %v203
    %v218 = vtanh.pop %v208
    %v219 = vld [vmem:[%s3] sm:$0xff]
    %v220 = vld [vmem:[%s3 + $0x8] sm:$0xff]
    %v221 = vld [vmem:[%s4] sm:$0xff]
    %v222 = vld [vmem:[%s4 + $0x8] sm:$0xff]
    %224 = vset.pattern.permute.xlu0 0
    %225 = vperm.xlu0 %224, %v221
    %v226 = vpop.permute.xlu0 %225
    %229 = vset.pattern.permute.xlu0 0
    %230 = vperm.xlu0 %229, %v222
    %v231 = vpop.permute.xlu0 %230
    %vm233 = vcmask 523264
    %v235 = vsel %vm233, %v219, 0
    %v238 = vsel %vm233, %v220, 0
    %240 = vmatprep.subr.mxu0 0.0
    %241 = vmatpush1.msra.mxu0 0.0
    %242 = vmatprep.subr.mxu0 0.0
    %243 = vmatpush1.msra.mxu0 0.0
    %244 = vmatprep.subr.mxu0 0.0
    %245 = vmatpush1.msra.mxu0 0.0
    %246 = vmatprep.subr.mxu0 0.0
    %247 = vmatpush1.msra.mxu0 0.0
    %248 = vmatprep.subr.mxu0 0.0
    %249 = vmatpush1.msra.mxu0 0.0
    %250 = vmatprep.subr.mxu0 0.0
    %251 = vmatpush1.msra.mxu0 0.0
    %252 = vmatprep.subr.mxu0 0.0
    %253 = vmatpush1.msra.mxu0 0.0
    %254 = vmatprep.subr.mxu0 0.0
    %255 = vmatpush1.msra.mxu0 0.0
    %256 = vmatprep.subr.mxu0 0.0
    %257 = vmatpush1.msra.mxu0 %v218
    %258 = vmatprep.subr.mxu0 0.0
    %259 = vmatpush1.msra.mxu0 %v217
    %260 = vmatprep.subr.mxu0 0.0
    %261 = vmatpush1.msra.mxu0 %v216
    %262 = vmatprep.subr.mxu0 0.0
    %263 = vmatpush1.msra.mxu0 %v215
    %264 = vmatprep.subr.mxu0 0.0
    %265 = vmatpush1.msra.mxu0 %v214
    %266 = vmatprep.subr.mxu0 0.0
    %267 = vmatpush1.msra.mxu0 %v213
    %268 = vmatprep.subr.mxu0 0.0
    %269 = vmatpush1.msra.mxu0 %v212
    %270 = vmatprep.subr.mxu0 0.0
    %271 = vmatpush1.msra.mxu0 %v211
    %272 = vmatprep.subr.mxu0 0.0
    %273 = vmatpush2.msra.mxu0 0.0
    %274 = vmatprep.subr.mxu0 0.0
    %275 = vmatpush2.msra.mxu0 0.0
    %276 = vmatprep.subr.mxu0 0.0
    %277 = vmatpush2.msra.mxu0 0.0
    %278 = vmatprep.subr.mxu0 0.0
    %279 = vmatpush2.msra.mxu0 0.0
    %280 = vmatprep.subr.mxu0 0.0
    %281 = vmatpush2.msra.mxu0 0.0
    %282 = vmatprep.subr.mxu0 0.0
    %283 = vmatpush2.msra.mxu0 0.0
    %284 = vmatprep.subr.mxu0 0.0
    %285 = vmatpush2.msra.mxu0 0.0
    %286 = vmatprep.subr.mxu0 0.0
    %287 = vmatpush2.msra.mxu0 0.0
    %288 = vmatprep.subr.mxu0 0.0
    %289 = vmatpush2.msra.mxu0 0.0
    %290 = vmatprep.subr.mxu0 0.0
    %291 = vmatpush2.msra.mxu0 0.0
    %292 = vmatprep.subr.mxu0 0.0
    %293 = vmatpush2.msra.mxu0 0.0
    %294 = vmatprep.subr.mxu0 0.0
    %295 = vmatpush2.msra.mxu0 0.0
    %296 = vmatprep.subr.mxu0 0.0
    %297 = vmatpush2.msra.mxu0 0.0
    %298 = vmatprep.subr.mxu0 0.0
    %299 = vmatpush2.msra.mxu0 0.0
    %300 = vmatprep.subr.mxu0 0.0
    %301 = vmatpush2.msra.mxu0 0.0
    %302 = vmatprep.subr.mxu0 0.0
    %303 = vmatpush2.msra.mxu0 0.0
    %304 = vmatprep.mubr.f32.mxu0 0.0
    %305 = vmatmul.mubr.f32.gmra.mxu0 %v235
    %v306 = vpop.f32.mrf.mxu0
    %v307 = vadd.f32 %v226, %v306
    %v308 = vpop.f32.mrf.mxu0
    %309 = vmatprep.mubr.f32.mxu0 0.0
    %310 = vmatmul.mubr.f32.gmra.mxu0 %v238
    %v311 = vpop.f32.mrf.mxu0
    %v312 = vadd.f32 %v231, %v311
    %v313 = vpop.f32.mrf.mxu0
    %314 = vdwg.mxu0
    %v315 = vtanh.pop %v307
    %v316 = vtanh.pop %v312
    %317 = vst [vmem:[#allocation2] sm:$0xff] %v315
    %318 = vst [vmem:[#allocation2 + $0x8] sm:$0xff] %v316
    // Predicated region
    $region22: #{tpu_custom_call.1} parent=1 // pred_check
      _
    $region23: #{tpu_custom_call.1} parent=1 // pred_check_branch
      %320 = sbr.rel (0) target = $region25
    $region24: #{tpu_custom_call.1} parent=1 // pred_region
      %s322 = ssub.s32 256, 256
      %323 = vsyncadd [#allocation3], %s322
      %s324 = sshll.u32 [#allocation2], 4
      %s325 = int_to_ptr.vmem [resolvable:$true] %s324
      %330 = dma.vmem_to_hbm [thread:$0]  %s325, 256, %s5, [#allocation3], 128, 128, 8
    $region25: #{tpu_custom_call.1} parent=1 // pred_fallthru
      _
    // Predicated region
    $region26: #{tpu_custom_call.1} parent=1 // pred_check
      _
    $region27: #{tpu_custom_call.1} parent=1 // pred_check_branch
      %332 = sbr.rel (0) target = $region29
    $region28: #{tpu_custom_call.1} parent=1 // pred_region
      %333 = dma.done [#allocation3], 256
    $region29: #{tpu_custom_call.1} parent=1 // pred_fallthru
      _
    %334 = vsyncpa [#allocation3], 1

</llo_original>
